<compile_context>
chip_gen: v7x
topology: tpu7x:2x2x1
jax: 0.10.0
libtpu: 0.0.40
codegen_flags: <defaults>
</compile_context>

<pallas_src>
import math
import functools

import jax
import jax.numpy as jnp
from jax import lax
from jax.experimental import pallas as pl
from jax.experimental.pallas import tpu as pltpu


def _vmem_limit_bytes():
    """~15% headroom below physical VMEM (v7x: ~54 MiB, v5e/v6e: ~109 MiB)."""
    try:
        cap = pltpu.get_tpu_info().vmem_capacity_bytes
    except Exception:
        cap = 128 * 1024 * 1024          # v5e/v6e-sized default if query fails
    return int(cap * 0.85)


def _single_buffered(block_shape, index_map):
    """BlockSpec for a grid-constant operand: request single buffering
    (double-buffering a loop-invariant weight only doubles its VMEM cost)."""
    try:
        return pl.BlockSpec(block_shape, index_map, pipeline_mode=pl.Buffered(1))
    except (TypeError, AttributeError):   # older jax without pipeline_mode
        return pl.BlockSpec(block_shape, index_map)


# --------------------------------------------------------------------------
# Kernel 1: QKV projections + QK RMSNorm (run once per sequence tile).
# --------------------------------------------------------------------------
def _qkv_norm_kernel(x_ref, wq_ref, wk_ref, wv_ref, q_ref, k_ref, v_ref, *,
                     inv_sqrt_d, eps):
    cdt = q_ref.dtype
    x = x_ref[...]                                           # (TS, E) native dtype

    # Projections: native-dtype MXU operands, f32 accumulation.
    q = jnp.dot(x, wq_ref[...], preferred_element_type=jnp.float32)
    k = jnp.dot(x, wk_ref[...], preferred_element_type=jnp.float32)
    # v is never normalized: fuse the down-cast into the dot result so no
    # (TS, E) f32 intermediate stays live.
    v = jnp.dot(x, wv_ref[...], preferred_element_type=jnp.float32).astype(cdt)

    # QKNorm: RMSNorm (no affine) over the FULL projection dim, f32 math.
    # The attention 1/sqrt(head_dim) scale is folded into q's norm factor.
    q = q * (lax.rsqrt(jnp.mean(q * q, axis=-1, keepdims=True) + eps) * inv_sqrt_d)
    k = k * lax.rsqrt(jnp.mean(k * k, axis=-1, keepdims=True) + eps)

    q_ref[...] = q.astype(cdt)
    k_ref[...] = k.astype(cdt)
    v_ref[...] = v


# --------------------------------------------------------------------------
# Kernel 2: scaled-dot-product attention, one (batch, head, q-tile) per step.
# --------------------------------------------------------------------------
def _mha_kernel(q_ref, k_ref, v_ref, o_ref):
    cdt = q_ref.dtype
    qh = q_ref[...]                      # (TQ, D)  (scale already folded in)
    kh = k_ref[...]                      # (S,  D)
    vh = v_ref[...]                      # (S,  D)

    # QK^T contracting the last dims (no explicit kh.T); f32 scores.
    s = lax.dot_general(qh, kh, (((1,), (1,)), ((), ())),
                        preferred_element_type=jnp.float32)     # (TQ, S)
    s = s - jnp.max(s, axis=-1, keepdims=True)
    p = jnp.exp(s)
    p = p * pl.reciprocal(jnp.sum(p, axis=-1, keepdims=True), approx=True)

    o_ref[...] = jnp.dot(p.astype(cdt), vh,
                         preferred_element_type=jnp.float32).astype(o_ref.dtype)


# --------------------------------------------------------------------------
# Kernel 3: output projection wo.
# --------------------------------------------------------------------------
def _out_proj_kernel(a_ref, wo_ref, o_ref):
    o_ref[...] = jnp.dot(a_ref[...], wo_ref[...],
                         preferred_element_type=jnp.float32).astype(o_ref.dtype)


def attention_forward(x, wq, wk, wv, wo, *, num_heads, eps=1e-5,
                      seq_block=None, compute_dtype=None):
    """Forward pass of the PyTorch `Attention` module (mask=None, eval mode).

    x: (B, S, E); wq/wk/wv/wo: (E, E) laid out as (in, out) (pre-transposed
    nn.Linear weights).  Pass compute_dtype=jnp.bfloat16 to cast x / weights
    at the wrapper for full MXU throughput; norm/softmax math stays in f32.
    """
    B, S, E = x.shape
    assert E % num_heads == 0
    D = E // num_heads

    cdt = jnp.dtype(compute_dtype) if compute_dtype is not None else x.dtype
    x = x.astype(cdt)
    wq, wk, wv, wo = (w.astype(cdt) for w in (wq, wk, wv, wo))
    isz = jnp.dtype(cdt).itemsize

    if seq_block is None:
        seq_block = S
        for t in (512, 256, 128, 64, 32, 16, 8):
            if S % t == 0:
                seq_block = t
                break
    assert S % seq_block == 0 and (seq_block % 8 == 0 or seq_block == S)
    n_tiles = S // seq_block

    vmem_limit = _vmem_limit_bytes()
    seq_spec = pl.BlockSpec((None, seq_block, E), lambda b, si: (b, si, 0))

    # --- 1) QKV projections + QK RMSNorm (no per-query-tile recompute). -----
    qkv_kernel = functools.partial(_qkv_norm_kernel,
                                   inv_sqrt_d=1.0 / math.sqrt(D), eps=eps)
    q, k, v = pl.pallas_call(
        qkv_kernel,
        out_shape=(jax.ShapeDtypeStruct((B, S, E), cdt),
                   jax.ShapeDtypeStruct((B, S, E), cdt),
                   jax.ShapeDtypeStruct((B, S, E), cdt)),
        grid=(B, n_tiles),
        in_specs=[
            seq_spec,
            _single_buffered((E, E), lambda b, si: (0, 0)),
            _single_buffered((E, E), lambda b, si: (0, 0)),
            _single_buffered((E, E), lambda b, si: (0, 0)),
        ],
        out_specs=(seq_spec, seq_spec, seq_spec),
        compiler_params=pltpu.CompilerParams(
            dimension_semantics=("parallel", "parallel"),
            vmem_limit_bytes=vmem_limit),
        cost_estimate=pl.CostEstimate(
            flops=6 * B * S * E * E,
            transcendentals=2 * B * S,
            bytes_accessed=(4 * B * S * E + 3 * E * E) * isz),
    )(x, wq, wk, wv)

    # --- 2) Attention on head-major (B, H, S, D) blocks. The head split is a
    #        cheap XLA transpose in the wrapper so the kernel never lane-slices
    #        sub-128 head chunks; grid (B, H, q-tile) is fully parallel. ------
    def to_heads(t):
        return t.reshape(B, S, num_heads, D).transpose(0, 2, 1, 3)

    qh, kh, vh = to_heads(q), to_heads(k), to_heads(v)

    q_spec = pl.BlockSpec((None, None, seq_block, D),
                          lambda b, h, qi: (b, h, qi, 0))
    kv_spec = pl.BlockSpec((None, None, S, D),
                           lambda b, h, qi: (b, h, 0, 0))
    att = pl.pallas_call(
        _mha_kernel,
        out_shape=jax.ShapeDtypeStruct((B, num_heads, S, D), cdt),
        grid=(B, num_heads, n_tiles),
        in_specs=[q_spec, kv_spec, kv_spec],
        out_specs=q_spec,
        compiler_params=pltpu.CompilerParams(
            dimension_semantics=("parallel", "parallel", "parallel"),
            vmem_limit_bytes=vmem_limit),
        cost_estimate=pl.CostEstimate(
            flops=4 * B * S * S * E,
            transcendentals=B * num_heads * S * S,
            bytes_accessed=4 * B * S * E * isz),
    )(qh, kh, vh)
    # TODO(synk): for very long S, replace the full-S resident K/V block with a
    # flash-style KV-block grid axis + online softmax (bounds VMEM on v7x).

    # --- 3) Output projection (lane-dense E contraction). -------------------
    att = att.transpose(0, 2, 1, 3).reshape(B, S, E)
    out = pl.pallas_call(
        _out_proj_kernel,
        out_shape=jax.ShapeDtypeStruct((B, S, E), cdt),
        grid=(B, n_tiles),
        in_specs=[seq_spec, _single_buffered((E, E), lambda b, si: (0, 0))],
        out_specs=seq_spec,
        compiler_params=pltpu.CompilerParams(
            dimension_semantics=("parallel", "parallel"),
            vmem_limit_bytes=vmem_limit),
        cost_estimate=pl.CostEstimate(
            flops=2 * B * S * E * E,
            transcendentals=0,
            bytes_accessed=(2 * B * S * E + E * E) * isz),
    )(att, wo)
    # TODO(synk): the head-merge transpose above is plain XLA glue; for very
    # large shapes fuse it by having kernel (1) emit head-major q/k/v directly.
    return out


def attention_reference(x, wq, wk, wv, wo, *, num_heads, eps=1e-5):
    """Pure-JAX reference mirroring the PyTorch forward (mask=None, eval)."""
    B, S, E = x.shape
    D = E // num_heads
    xf = x.astype(jnp.float32)
    q = xf @ wq
    k = xf @ wk
    v = xf @ wv
    q = q * jax.lax.rsqrt(jnp.mean(q * q, axis=-1, keepdims=True) + eps)
    k = k * jax.lax.rsqrt(jnp.mean(k * k, axis=-1, keepdims=True) + eps)
    qh = q.reshape(B, S, num_heads, D).transpose(0, 2, 1, 3)
    kh = k.reshape(B, S, num_heads, D).transpose(0, 2, 1, 3)
    vh = v.reshape(B, S, num_heads, D).transpose(0, 2, 1, 3)
    scores = jnp.einsum("bhqd,bhkd->bhqk", qh, kh) / math.sqrt(D)
    probs = jax.nn.softmax(scores, axis=-1)
    out = jnp.einsum("bhqk,bhkd->bhqd", probs, vh)
    out = out.transpose(0, 2, 1, 3).reshape(B, S, E)
    return (out @ wo).astype(x.dtype)


if __name__ == "__main__":
    # Small but lane-dense shapes: E multiple of 128, S multiple of 8.
    B, S, E, H = 2, 16, 128, 4   # batch, seq (h_w), embed_dim, num_heads

    key = jax.random.PRNGKey(0)
    kx, kq, kk, kv, ko = jax.random.split(key, 5)

    x = jax.random.normal(kx, (B, S, E), dtype=jnp.float32)
    bound = 1.0 / math.sqrt(E)     # nn.Linear init range; stored as (in, out)
    wq = jax.random.uniform(kq, (E, E), jnp.float32, -bound, bound)
    wk = jax.random.uniform(kk, (E, E), jnp.float32, -bound, bound)
    wv = jax.random.uniform(kv, (E, E), jnp.float32, -bound, bound)
    wo = jax.random.uniform(ko, (E, E), jnp.float32, -bound, bound)

    # seq_block=8 -> grids (2,2), (2,4,2), (2,2): exercises the tiling paths.
    out = attention_forward(x, wq, wk, wv, wo, num_heads=H, seq_block=8)
    out = jax.block_until_ready(out)

    ref = attention_reference(x, wq, wk, wv, wo, num_heads=H)
    assert out.shape == (B, S, E)
    # Tolerance accounts for the approximate (EUP) softmax reciprocal.
    assert jnp.allclose(out, ref, atol=5e-3, rtol=5e-3), "mismatch vs reference"

    # bf16 compute path (production MXU dtype) -- smoke run.
    out_bf16 = attention_forward(x, wq, wk, wv, wo, num_heads=H, seq_block=8,
                                 compute_dtype=jnp.bfloat16)
    jax.block_until_ready(out_bf16)

    # TODO(synk): additive-mask / dropout paths are not implemented
    # (module defaults: dropout=0.0, mask=None, eval mode).
    print("KERNEL_OK")
</pallas_src>

<mosaic_0001>
module attributes {stable_mosaic.version = 11 : i64} {
  func.func @_qkv_norm_kernel(%arg0: i32, %arg1: i32, %arg2: memref<1x8x128xf32, #tpu.memory_space<vmem>>, %arg3: memref<128x128xf32, #tpu.memory_space<vmem>>, %arg4: memref<128x128xf32, #tpu.memory_space<vmem>>, %arg5: memref<128x128xf32, #tpu.memory_space<vmem>>, %arg6: memref<1x8x128xf32, #tpu.memory_space<vmem>>, %arg7: memref<1x8x128xf32, #tpu.memory_space<vmem>>, %arg8: memref<1x8x128xf32, #tpu.memory_space<vmem>>) attributes {dimension_semantics = [#tpu.dimension_semantics<parallel>, #tpu.dimension_semantics<parallel>], iteration_bounds = array<i64: 2, 2>, scalar_prefetch = 0 : i64, scratch_operands = 0 : i64, tpu.core_type = #tpu.core_type<tc>, window_params = [{transform_indices = @transform_0, window_bounds = array<i64: 1, 8, 128>}, {pipeline_mode = #tpu.pipeline_mode<synchronous>, transform_indices = @transform_1, window_bounds = array<i64: 128, 128>}, {pipeline_mode = #tpu.pipeline_mode<synchronous>, transform_indices = @transform_2, window_bounds = array<i64: 128, 128>}, {pipeline_mode = #tpu.pipeline_mode<synchronous>, transform_indices = @transform_3, window_bounds = array<i64: 128, 128>}, {transform_indices = @transform_4, window_bounds = array<i64: 1, 8, 128>}, {transform_indices = @transform_5, window_bounds = array<i64: 1, 8, 128>}, {transform_indices = @transform_6, window_bounds = array<i64: 1, 8, 128>}]} {
    %c0 = arith.constant 0 : index
    %c0_0 = arith.constant 0 : index
    %c0_1 = arith.constant 0 : index
    %0 = vector.load %arg2[%c0, %c0_0, %c0_1] : memref<1x8x128xf32, #tpu.memory_space<vmem>>, vector<1x8x128xf32>
    %1 = vector.shape_cast %0 : vector<1x8x128xf32> to vector<8x128xf32>
    %c0_2 = arith.constant 0 : index
    %c0_3 = arith.constant 0 : index
    %2 = vector.load %arg3[%c0_2, %c0_3] : memref<128x128xf32, #tpu.memory_space<vmem>>, vector<128x128xf32>
    %cst = arith.constant dense<0.000000e+00> : vector<8x128xf32>
    %3 = tpu.matmul %1, %2, %cst {dimension_numbers = #tpu.dot_dimension_numbers<[1], [0], [0], [1], [0, 0, 1, 1], [], []>} : vector<8x128xf32>, vector<128x128xf32>, vector<8x128xf32> -> vector<8x128xf32>
    %c0_4 = arith.constant 0 : index
    %c0_5 = arith.constant 0 : index
    %4 = vector.load %arg4[%c0_4, %c0_5] : memref<128x128xf32, #tpu.memory_space<vmem>>, vector<128x128xf32>
    %cst_6 = arith.constant dense<0.000000e+00> : vector<8x128xf32>
    %5 = tpu.matmul %1, %4, %cst_6 {dimension_numbers = #tpu.dot_dimension_numbers<[1], [0], [0], [1], [0, 0, 1, 1], [], []>} : vector<8x128xf32>, vector<128x128xf32>, vector<8x128xf32> -> vector<8x128xf32>
    %c0_7 = arith.constant 0 : index
    %c0_8 = arith.constant 0 : index
    %6 = vector.load %arg5[%c0_7, %c0_8] : memref<128x128xf32, #tpu.memory_space<vmem>>, vector<128x128xf32>
    %cst_9 = arith.constant dense<0.000000e+00> : vector<8x128xf32>
    %7 = tpu.matmul %1, %6, %cst_9 {dimension_numbers = #tpu.dot_dimension_numbers<[1], [0], [0], [1], [0, 0, 1, 1], [], []>} : vector<8x128xf32>, vector<128x128xf32>, vector<8x128xf32> -> vector<8x128xf32>
    %8 = arith.mulf %3, %3 : vector<8x128xf32>
    %cst_10 = arith.constant dense<0.000000e+00> : vector<8xf32>
    %9 = vector.multi_reduction <add>, %8, %cst_10 [1] : vector<8x128xf32> to vector<8xf32>
    %10 = vector.shape_cast %9 : vector<8xf32> to vector<8x1xf32>
    %cst_11 = arith.constant 1.280000e+02 : f32
    %11 = vector.broadcast %cst_11 : f32 to vector<8x1xf32>
    %12 = arith.divf %10, %11 : vector<8x1xf32>
    %cst_12 = arith.constant 9.99999974E-6 : f32
    %13 = vector.broadcast %cst_12 : f32 to vector<8x1xf32>
    %14 = arith.addf %12, %13 : vector<8x1xf32>
    %15 = math.rsqrt %14 : vector<8x1xf32>
    %cst_13 = arith.constant 0.176776692 : f32
    %16 = vector.broadcast %cst_13 : f32 to vector<8x1xf32>
    %17 = arith.mulf %15, %16 : vector<8x1xf32>
    %18 = vector.broadcast %17 : vector<8x1xf32> to vector<8x128xf32>
    %19 = arith.mulf %3, %18 : vector<8x128xf32>
    %20 = arith.mulf %5, %5 : vector<8x128xf32>
    %cst_14 = arith.constant dense<0.000000e+00> : vector<8xf32>
    %21 = vector.multi_reduction <add>, %20, %cst_14 [1] : vector<8x128xf32> to vector<8xf32>
    %22 = vector.shape_cast %21 : vector<8xf32> to vector<8x1xf32>
    %cst_15 = arith.constant 1.280000e+02 : f32
    %23 = vector.broadcast %cst_15 : f32 to vector<8x1xf32>
    %24 = arith.divf %22, %23 : vector<8x1xf32>
    %cst_16 = arith.constant 9.99999974E-6 : f32
    %25 = vector.broadcast %cst_16 : f32 to vector<8x1xf32>
    %26 = arith.addf %24, %25 : vector<8x1xf32>
    %27 = math.rsqrt %26 : vector<8x1xf32>
    %28 = vector.broadcast %27 : vector<8x1xf32> to vector<8x128xf32>
    %29 = arith.mulf %5, %28 : vector<8x128xf32>
    %c0_17 = arith.constant 0 : index
    %c0_18 = arith.constant 0 : index
    %c0_19 = arith.constant 0 : index
    %30 = vector.load %arg6[%c0_17, %c0_18, %c0_19] : memref<1x8x128xf32, #tpu.memory_space<vmem>>, vector<1x8x128xf32>
    %31 = vector.shape_cast %30 : vector<1x8x128xf32> to vector<8x128xf32>
    %32 = vector.shape_cast %19 : vector<8x128xf32> to vector<1x8x128xf32>
    tpu.vector_store %arg6[%c0_17, %c0_18, %c0_19], %32 {strides = array<i32>} : memref<1x8x128xf32, #tpu.memory_space<vmem>>, vector<1x8x128xf32>,
    %c0_20 = arith.constant 0 : index
    %c0_21 = arith.constant 0 : index
    %c0_22 = arith.constant 0 : index
    %33 = vector.load %arg7[%c0_20, %c0_21, %c0_22] : memref<1x8x128xf32, #tpu.memory_space<vmem>>, vector<1x8x128xf32>
    %34 = vector.shape_cast %33 : vector<1x8x128xf32> to vector<8x128xf32>
    %35 = vector.shape_cast %29 : vector<8x128xf32> to vector<1x8x128xf32>
    tpu.vector_store %arg7[%c0_20, %c0_21, %c0_22], %35 {strides = array<i32>} : memref<1x8x128xf32, #tpu.memory_space<vmem>>, vector<1x8x128xf32>,
    %c0_23 = arith.constant 0 : index
    %c0_24 = arith.constant 0 : index
    %c0_25 = arith.constant 0 : index
    %36 = vector.load %arg8[%c0_23, %c0_24, %c0_25] : memref<1x8x128xf32, #tpu.memory_space<vmem>>, vector<1x8x128xf32>
    %37 = vector.shape_cast %36 : vector<1x8x128xf32> to vector<8x128xf32>
    %38 = vector.shape_cast %7 : vector<8x128xf32> to vector<1x8x128xf32>
    tpu.vector_store %arg8[%c0_23, %c0_24, %c0_25], %38 {strides = array<i32>} : memref<1x8x128xf32, #tpu.memory_space<vmem>>, vector<1x8x128xf32>,
    return
  }
  func.func @transform_0(%arg0: i32, %arg1: i32) -> (i32, i32, i32) {
    %c0_i32 = arith.constant 0 : i32
    %c0_i32_0 = arith.constant 0 : i32
    return %arg0, %arg1, %c0_i32 : i32, i32, i32
  }
  func.func @transform_1(%arg0: i32, %arg1: i32) -> (i32, i32) {
    %c0_i32 = arith.constant 0 : i32
    %c0_i32_0 = arith.constant 0 : i32
    %c0_i32_1 = arith.constant 0 : i32
    return %c0_i32, %c0_i32_0 : i32, i32
  }
  func.func @transform_2(%arg0: i32, %arg1: i32) -> (i32, i32) {
    %c0_i32 = arith.constant 0 : i32
    %c0_i32_0 = arith.constant 0 : i32
    %c0_i32_1 = arith.constant 0 : i32
    return %c0_i32, %c0_i32_0 : i32, i32
  }
  func.func @transform_3(%arg0: i32, %arg1: i32) -> (i32, i32) {
    %c0_i32 = arith.constant 0 : i32
    %c0_i32_0 = arith.constant 0 : i32
    %c0_i32_1 = arith.constant 0 : i32
    return %c0_i32, %c0_i32_0 : i32, i32
  }
  func.func @transform_4(%arg0: i32, %arg1: i32) -> (i32, i32, i32) {
    %c0_i32 = arith.constant 0 : i32
    %c0_i32_0 = arith.constant 0 : i32
    return %arg0, %arg1, %c0_i32 : i32, i32, i32
  }
  func.func @transform_5(%arg0: i32, %arg1: i32) -> (i32, i32, i32) {
    %c0_i32 = arith.constant 0 : i32
    %c0_i32_0 = arith.constant 0 : i32
    return %arg0, %arg1, %c0_i32 : i32, i32, i32
  }
  func.func @transform_6(%arg0: i32, %arg1: i32) -> (i32, i32, i32) {
    %c0_i32 = arith.constant 0 : i32
    %c0_i32_0 = arith.constant 0 : i32
    return %arg0, %arg1, %c0_i32 : i32, i32, i32
  }
}

</mosaic_0001>

<llo_original>
// kernel: tpu_custom_call.1
$region0: #{tpu_custom_call.1}
  #allocation0 [shape = 'u32[]', space=smem, size = 0x4, offset = 0x4, fixed_abs, tag = 'smem constant byte address 0x4 - core index']
  #allocation1 [shape = 'u32[144,128]{1,0:T(1,128)}', space=vmem, size = 0x12000, scoped, tag = 'internal scratch']
  %s0 = inlined_call_operand.hbm [shape: f32[2,16,128], index: 0, kind: input, shape index: {}]
  %s1 = inlined_call_operand.hbm [shape: f32[128,128], index: 1, kind: input, shape index: {}]
  %s2 = inlined_call_operand.hbm [shape: f32[128,128], index: 2, kind: input, shape index: {}]
  %s3 = inlined_call_operand.hbm [shape: f32[128,128], index: 3, kind: input, shape index: {}]
  %s4 = inlined_call_operand.hbm [shape: f32[2,16,128], index: 4, kind: output, shape index: {0}]
  %s5 = inlined_call_operand.hbm [shape: f32[2,16,128], index: 5, kind: output, shape index: {1}]
  %s6 = inlined_call_operand.hbm [shape: f32[2,16,128], index: 6, kind: output, shape index: {2}]
  %7 = xla_tuple %s4, %s5, %s6
  %s8 = sld [smem:[#allocation0]]
  $region81: #{tpu_custom_call.1} parent=0
    _
  %s10 = ssub.s32 1, %s8
  %s11 = scalar_select 0, %s10, %s8
  $region1: #{tpu_custom_call.1} parent=0
    #allocation2 [shape = 'u8[8192]{0}', space=vmem, size = 0x2000, scoped, tag = 'input window, operand 0']
    #allocation3 [shape = 's32[2]{0}', space=sflag, size = 0x8, scoped, tag = 'scoped memory for tpu_custom_call.1']
    #allocation4 [shape = 's32[2]{0}', space=sflag, size = 0x8, scoped, tag = 'scoped memory for tpu_custom_call.1']
    #allocation5 [shape = 'u8[65536]{0}', space=vmem, size = 0x10000, scoped, tag = 'input window, operand 1, single buffered']
    #allocation6 [shape = 's32[1]{0}', space=sflag, size = 0x4, scoped, tag = 'scoped memory for tpu_custom_call.1']
    #allocation7 [shape = 'u8[65536]{0}', space=vmem, size = 0x10000, scoped, tag = 'input window, operand 2, single buffered']
    #allocation8 [shape = 'u8[65536]{0}', space=vmem, size = 0x10000, scoped, tag = 'input window, operand 3, single buffered']
    #allocation9 [shape = 's32[1]{0}', space=sflag, size = 0x4, scoped, tag = 'scoped memory for tpu_custom_call.1']
    #allocation10 [shape = 'u8[8192]{0}', space=vmem, size = 0x2000, scoped, tag = 'output window, operand 0']
    #allocation11 [shape = 'u8[8192]{0}', space=vmem, size = 0x2000, scoped, tag = 'output window, operand 1']
    #allocation12 [shape = 's32[2]{0}', space=sflag, size = 0x8, scoped, tag = 'scoped memory for tpu_custom_call.1']
    #allocation13 [shape = 'u8[8192]{0}', space=vmem, size = 0x2000, scoped, tag = 'output window, operand 2']
    %12 = vsyncpa [#allocation3], 0
    %s13 = scalar_lea.sflag [#allocation3], 1
    %14 = vsyncpa %s13, 0
    %15 = vsyncpa [#allocation6], 0
    %16 = vsyncpa [#allocation9], 0
    %17 = vsyncpa [#allocation4], 0
    %s18 = scalar_lea.sflag [#allocation4], 1
    %19 = vsyncpa %s18, 0
    %20 = vsyncpa [#allocation12], 0
    %s21 = scalar_lea.sflag [#allocation12], 1
    %22 = vsyncpa %s21, 0
    loop: start=0, step=1, limit=6
    $region2: #{tpu_custom_call.1} parent=1 // loop_pre_header
      _
    $region3: #{tpu_custom_call.1} parent=1 // loop_header
      %s24 = sphi 0, %s28
      %p25 = scmp.ge.s32.totalorder %s24, 6
      %s31 = sphi 0, %s43
      %s32 = sphi 0, %s39
      %s33 = sphi 0, %s31
      %s34 = sphi 0, %s32
      %s35 = sphi 0, %s33
      %s36 = sphi 0, %s34
      %s48 = sphi 0, %s50
      %s51 = sphi 0, %s48
      %s52 = sphi 0, %s51
      %s68 = sphi 0, %s52
      %s72 = sphi 0, %s72
      %s74 = sphi 0, %s72
      %s75 = sphi 0, %s74
      %s89 = sphi 0, %s75
      %s93 = sphi 0, %s93
      %s95 = sphi 0, %s93
      %s96 = sphi 0, %s95
      %s110 = sphi 0, %s96
      %s114 = sphi 0, %s114
      %s116 = sphi 0, %s114
      %s117 = sphi 0, %s116
      %s131 = sphi 0, %s117
      %s139 = sphi 0, %s141
      %s142 = sphi 0, %s139
      %s143 = sphi 0, %s142
      %s159 = sphi 0, %s143
      %s167 = sphi 0, %s169
      %s170 = sphi 0, %s167
      %s171 = sphi 0, %s170
      %s187 = sphi 0, %s171
      %s195 = sphi 0, %s197
      %s198 = sphi 0, %s195
      %s199 = sphi 0, %s198
      %s215 = sphi 0, %s199
    $region4: #{tpu_custom_call.1} parent=1 // loop_header_branch
      %27 = sbr.rel (%p25) target = $region8
    $region5: #{tpu_custom_call.1} parent=1 // loop_body
      %s29 = ssub.s32 %s24, 1
      %s30 = ssub.s32 %s24, 2
      %s37 = sadd.s32 1, %s32
      %p38 = scmp.ge.s32.totalorder %s37, 2
      %s39 = scalar_select %p38, 0, %s37
      %s40 = sadd.s32 1, %s31
      %s41 = scalar_select %p38, %s40, %s31
      %p42 = scmp.ge.s32.totalorder %s41, 2
      %s43 = scalar_select %p42, 0, %s41
      %s44 = ssub.s32 %s31, %s43
      %s45 = ssub.s32 %s32, %s39
      %s46 = sor.u32 %s44, %s45
      %p47 = scmp.eq.s32.totalorder %s46, 0
      %s49 = sadd.s32 %s48, 1
      %s50 = scalar_select %p47, %s48, %s49
      %p53 = pneg %p47
      %p54 = scmp.eq.s32.totalorder %s24, 3
      %p55 = por %p53, %p54
      %p56 = scmp.ne.s32.totalorder %s48, %s51
      %p57 = scmp.eq.s32.totalorder %s24, 0
      %p58 = por %p56, %p57
      %p59 = scmp.ne.s32.totalorder %s48, %s51
      %p60 = scmp.eq.s32.totalorder %s29, 3
      %p61 = por %p59, %p60
      %p62 = scmp.ne.s32.totalorder %s51, %s52
      %p63 = scmp.eq.s32.totalorder %s29, 0
      %p64 = por %p62, %p63
      %p65 = scmp.ne.s32.totalorder %s51, %s52
      %p66 = scmp.eq.s32.totalorder %s30, 3
      %p67 = por %p65, %p66
      %p69 = scmp.ne.s32.totalorder %s52, %s68
      %p70 = scmp.eq.s32.totalorder %s30, 0
      %p71 = por %p69, %p70
      %s73 = sadd.s32 %s72, 1
      %p76 = scmp.eq.s32.totalorder %s24, 3
      %p77 = scmp.ne.s32.totalorder %s72, %s74
      %p78 = scmp.eq.s32.totalorder %s24, 0
      %p79 = por %p77, %p78
      %p80 = scmp.ne.s32.totalorder %s72, %s74
      %p81 = scmp.eq.s32.totalorder %s29, 3
      %p82 = por %p80, %p81
      %p83 = scmp.ne.s32.totalorder %s74, %s75
      %p84 = scmp.eq.s32.totalorder %s29, 0
      %p85 = por %p83, %p84
      %p86 = scmp.ne.s32.totalorder %s74, %s75
      %p87 = scmp.eq.s32.totalorder %s30, 3
      %p88 = por %p86, %p87
      %p90 = scmp.ne.s32.totalorder %s75, %s89
      %p91 = scmp.eq.s32.totalorder %s30, 0
      %p92 = por %p90, %p91
      %s94 = sadd.s32 %s93, 1
      %p97 = scmp.eq.s32.totalorder %s24, 3
      %p98 = scmp.ne.s32.totalorder %s93, %s95
      %p99 = scmp.eq.s32.totalorder %s24, 0
      %p100 = por %p98, %p99
      %p101 = scmp.ne.s32.totalorder %s93, %s95
      %p102 = scmp.eq.s32.totalorder %s29, 3
      %p103 = por %p101, %p102
      %p104 = scmp.ne.s32.totalorder %s95, %s96
      %p105 = scmp.eq.s32.totalorder %s29, 0
      %p106 = por %p104, %p105
      %p107 = scmp.ne.s32.totalorder %s95, %s96
      %p108 = scmp.eq.s32.totalorder %s30, 3
      %p109 = por %p107, %p108
      %p111 = scmp.ne.s32.totalorder %s96, %s110
      %p112 = scmp.eq.s32.totalorder %s30, 0
      %p113 = por %p111, %p112
      %s115 = sadd.s32 %s114, 1
      %p118 = scmp.eq.s32.totalorder %s24, 3
      %p119 = scmp.ne.s32.totalorder %s114, %s116
      %p120 = scmp.eq.s32.totalorder %s24, 0
      %p121 = por %p119, %p120
      %p122 = scmp.ne.s32.totalorder %s114, %s116
      %p123 = scmp.eq.s32.totalorder %s29, 3
      %p124 = por %p122, %p123
      %p125 = scmp.ne.s32.totalorder %s116, %s117
      %p126 = scmp.eq.s32.totalorder %s29, 0
      %p127 = por %p125, %p126
      %p128 = scmp.ne.s32.totalorder %s116, %s117
      %p129 = scmp.eq.s32.totalorder %s30, 3
      %p130 = por %p128, %p129
      %p132 = scmp.ne.s32.totalorder %s117, %s131
      %p133 = scmp.eq.s32.totalorder %s30, 0
      %p134 = por %p132, %p133
      %s135 = ssub.s32 %s31, %s43
      %s136 = ssub.s32 %s32, %s39
      %s137 = sor.u32 %s135, %s136
      %p138 = scmp.eq.s32.totalorder %s137, 0
      %s140 = sadd.s32 %s139, 1
      %s141 = scalar_select %p138, %s139, %s140
      %p144 = pneg %p138
      %p145 = scmp.eq.s32.totalorder %s24, 3
      %p146 = por %p144, %p145
      %p147 = scmp.ne.s32.totalorder %s139, %s142
      %p148 = scmp.eq.s32.totalorder %s24, 0
      %p149 = por %p147, %p148
      %p150 = scmp.ne.s32.totalorder %s139, %s142
      %p151 = scmp.eq.s32.totalorder %s29, 3
      %p152 = por %p150, %p151
      %p153 = scmp.ne.s32.totalorder %s142, %s143
      %p154 = scmp.eq.s32.totalorder %s29, 0
      %p155 = por %p153, %p154
      %p156 = scmp.ne.s32.totalorder %s142, %s143
      %p157 = scmp.eq.s32.totalorder %s30, 3
      %p158 = por %p156, %p157
      %p160 = scmp.ne.s32.totalorder %s143, %s159
      %p161 = scmp.eq.s32.totalorder %s30, 0
      %p162 = por %p160, %p161
      %s163 = ssub.s32 %s31, %s43
      %s164 = ssub.s32 %s32, %s39
      %s165 = sor.u32 %s163, %s164
      %p166 = scmp.eq.s32.totalorder %s165, 0
      %s168 = sadd.s32 %s167, 1
      %s169 = scalar_select %p166, %s167, %s168
      %p172 = pneg %p166
      %p173 = scmp.eq.s32.totalorder %s24, 3
      %p174 = por %p172, %p173
      %p175 = scmp.ne.s32.totalorder %s167, %s170
      %p176 = scmp.eq.s32.totalorder %s24, 0
      %p177 = por %p175, %p176
      %p178 = scmp.ne.s32.totalorder %s167, %s170
      %p179 = scmp.eq.s32.totalorder %s29, 3
      %p180 = por %p178, %p179
      %p181 = scmp.ne.s32.totalorder %s170, %s171
      %p182 = scmp.eq.s32.totalorder %s29, 0
      %p183 = por %p181, %p182
      %p184 = scmp.ne.s32.totalorder %s170, %s171
      %p185 = scmp.eq.s32.totalorder %s30, 3
      %p186 = por %p184, %p185
      %p188 = scmp.ne.s32.totalorder %s171, %s187
      %p189 = scmp.eq.s32.totalorder %s30, 0
      %p190 = por %p188, %p189
      %s191 = ssub.s32 %s31, %s43
      %s192 = ssub.s32 %s32, %s39
      %s193 = sor.u32 %s191, %s192
      %p194 = scmp.eq.s32.totalorder %s193, 0
      %s196 = sadd.s32 %s195, 1
      %s197 = scalar_select %p194, %s195, %s196
      %p200 = pneg %p194
      %p201 = scmp.eq.s32.totalorder %s24, 3
      %p202 = por %p200, %p201
      %p203 = scmp.ne.s32.totalorder %s195, %s198
      %p204 = scmp.eq.s32.totalorder %s24, 0
      %p205 = por %p203, %p204
      %p206 = scmp.ne.s32.totalorder %s195, %s198
      %p207 = scmp.eq.s32.totalorder %s29, 3
      %p208 = por %p206, %p207
      %p209 = scmp.ne.s32.totalorder %s198, %s199
      %p210 = scmp.eq.s32.totalorder %s29, 0
      %p211 = por %p209, %p210
      %p212 = scmp.ne.s32.totalorder %s198, %s199
      %p213 = scmp.eq.s32.totalorder %s30, 3
      %p214 = por %p212, %p213
      %p216 = scmp.ne.s32.totalorder %s199, %s215
      %p217 = scmp.eq.s32.totalorder %s30, 0
      %p218 = por %p216, %p217
      %p219 = scmp.le.s32.totalorder 1, %s24
      %p220 = scmp.lt.s32.totalorder %s24, 5
      %p221 = pnand %p219, %p220
      %p222 = pneg %p221
      // Predicated region
      $region9: #{tpu_custom_call.1} parent=5 // pred_check
        _
      $region10: #{tpu_custom_call.1} parent=5 // pred_check_branch
        %224 = sbr.rel (%p221) target = $region12
      $region11: #{tpu_custom_call.1} parent=5 // pred_region
        %s225 = ssub.s32 %s24, 1
        // Predicated region
        $region13: #{tpu_custom_call.1} parent=11 // pred_check
          %p226 = pneg %p85
        $region14: #{tpu_custom_call.1} parent=11 // pred_check_branch
          %228 = sbr.rel (%p226) target = $region16
        $region15: #{tpu_custom_call.1} parent=11 // pred_region
          %s230 = ssub.s32 2048, 2048
          %231 = vsyncadd [#allocation6], %s230
          %s232 = sshll.u32 [#allocation5], 4
          %s233 = int_to_ptr.vmem [resolvable:$true] %s232
          %238 = dma.hbm_to_vmem [thread:$0]  %s1, 2048, %s233, [#allocation6], 128, 128, 8
        $region16: #{tpu_custom_call.1} parent=11 // pred_fallthru
          _
        // Predicated region
        $region17: #{tpu_custom_call.1} parent=11 // pred_check
          %p239 = pneg %p106
        $region18: #{tpu_custom_call.1} parent=11 // pred_check_branch
          %241 = sbr.rel (%p239) target = $region20
        $region19: #{tpu_custom_call.1} parent=11 // pred_region
          %s243 = ssub.s32 2048, 2048
          %244 = vsyncadd [#allocation6], %s243
          %s245 = sshll.u32 [#allocation7], 4
          %s246 = int_to_ptr.vmem [resolvable:$true] %s245
          %251 = dma.hbm_to_vmem [thread:$0]  %s2, 2048, %s246, [#allocation6], 128, 128, 8
        $region20: #{tpu_custom_call.1} parent=11 // pred_fallthru
          _
        // Predicated region
        $region21: #{tpu_custom_call.1} parent=11 // pred_check
          %p252 = pneg %p127
        $region22: #{tpu_custom_call.1} parent=11 // pred_check_branch
          %254 = sbr.rel (%p252) target = $region24
        $region23: #{tpu_custom_call.1} parent=11 // pred_region
          %s256 = ssub.s32 2048, 2048
          %257 = vsyncadd [#allocation9], %s256
          %s258 = sshll.u32 [#allocation8], 4
          %s259 = int_to_ptr.vmem [resolvable:$true] %s258
          %264 = dma.hbm_to_vmem [thread:$0]  %s3, 2048, %s259, [#allocation9], 128, 128, 8
        $region24: #{tpu_custom_call.1} parent=11 // pred_fallthru
          _
      $region12: #{tpu_custom_call.1} parent=5 // pred_fallthru
        _
      %p265 = scmp.lt.s32.totalorder %s24, 4
      // Predicated region
      $region25: #{tpu_custom_call.1} parent=5 // pred_check
        %p266 = pneg %p265
      $region26: #{tpu_custom_call.1} parent=5 // pred_check_branch
        %268 = sbr.rel (%p266) target = $region28
      $region27: #{tpu_custom_call.1} parent=5 // pred_region
        // Predicated region
        $region29: #{tpu_custom_call.1} parent=27 // pred_check
          %p269 = pneg %p58
        $region30: #{tpu_custom_call.1} parent=27 // pred_check_branch
          %271 = sbr.rel (%p269) target = $region32
        $region31: #{tpu_custom_call.1} parent=27 // pred_region
          %s272 = sand.u32 %s48, 1
          %s273 = scalar_lea.sflag [#allocation3], %s272
          %s274 = sand.u32 %s48, 1
          %s275 = smul.addr %s274, 8
          %s276 = scalar_lea.vmem [#allocation2], %s275
          %s278 = ssub.s32 128, 128
          %279 = vsyncadd %s273, %s278
          %s280 = smul.addr %s31, 2
          %s281 = sadd.s32 %s32, %s280
          %s282 = smul.addr %s281, 128
          %s283 = scalar_lea.hbm %s0, %s282
          %s285 = sshll.u32 %s276, 4
          %s286 = int_to_ptr.vmem [resolvable:$true] %s285
          %288 = dma.hbm_to_vmem [thread:$0]  %s283, 128, %s286, %s273
        $region32: #{tpu_custom_call.1} parent=27 // pred_fallthru
          _
      $region28: #{tpu_custom_call.1} parent=5 // pred_fallthru
        _
      %p289 = scmp.le.s32.totalorder 1, %s24
      %p290 = scmp.lt.s32.totalorder %s24, 5
      %p291 = pnand %p289, %p290
      %p292 = pneg %p291
      // Predicated region
      $region33: #{tpu_custom_call.1} parent=5 // pred_check
        _
      $region34: #{tpu_custom_call.1} parent=5 // pred_check_branch
        %294 = sbr.rel (%p291) target = $region36
      $region35: #{tpu_custom_call.1} parent=5 // pred_region
        %s295 = ssub.s32 %s24, 1
        %s296 = sand.u32 %s51, 1
        %s297 = scalar_lea.sflag [#allocation3], %s296
        %s298 = sand.u32 %s51, 1
        %s299 = smul.addr %s298, 8
        %s300 = scalar_lea.vmem [#allocation2], %s299
        // Predicated region
        $region37: #{tpu_custom_call.1} parent=35 // pred_check
          %p301 = pneg %p64
        $region38: #{tpu_custom_call.1} parent=35 // pred_check_branch
          %303 = sbr.rel (%p301) target = $region40
        $region39: #{tpu_custom_call.1} parent=35 // pred_region
          %304 = dma.done %s297, 128
        $region40: #{tpu_custom_call.1} parent=35 // pred_fallthru
          _
        // Predicated region
        $region41: #{tpu_custom_call.1} parent=35 // pred_check
          %p305 = pneg %p85
        $region42: #{tpu_custom_call.1} parent=35 // pred_check_branch
          %307 = sbr.rel (%p305) target = $region44
        $region43: #{tpu_custom_call.1} parent=35 // pred_region
          %308 = dma.done [#allocation6], 2048
        $region44: #{tpu_custom_call.1} parent=35 // pred_fallthru
          _
        // Predicated region
        $region45: #{tpu_custom_call.1} parent=35 // pred_check
          %p309 = pneg %p106
        $region46: #{tpu_custom_call.1} parent=35 // pred_check_branch
          %311 = sbr.rel (%p309) target = $region48
        $region47: #{tpu_custom_call.1} parent=35 // pred_region
          %312 = dma.done [#allocation6], 2048
        $region48: #{tpu_custom_call.1} parent=35 // pred_fallthru
          _
        // Predicated region
        $region49: #{tpu_custom_call.1} parent=35 // pred_check
          %p313 = pneg %p127
        $region50: #{tpu_custom_call.1} parent=35 // pred_check_branch
          %315 = sbr.rel (%p313) target = $region52
        $region51: #{tpu_custom_call.1} parent=35 // pred_region
          %316 = dma.done [#allocation9], 2048
        $region52: #{tpu_custom_call.1} parent=35 // pred_fallthru
          _
        %s317 = sand.u32 %s51, 1
        %s318 = scalar_lea.sflag [#allocation3], %s317
        %s319 = sand.u32 %s51, 1
        %s320 = smul.addr %s319, 8
        %s321 = scalar_lea.vmem [#allocation2], %s320
        %p322 = pneg %p64
        %p323 = pneg %p61
        %p324 = pneg %p85
        %p325 = pneg %p82
        %p326 = pneg %p106
        %p327 = pneg %p103
        %p328 = pneg %p127
        %p329 = pneg %p124
        %p330 = pneg %p155
        %p331 = pneg %p152
        %s332 = sand.u32 %s142, 1
        %s333 = scalar_lea.sflag [#allocation4], %s332
        %s334 = sand.u32 %s142, 1
        %s335 = smul.addr %s334, 8
        %s336 = scalar_lea.vmem [#allocation10], %s335
        %p337 = pneg %p183
        %p338 = pneg %p180
        %s339 = sand.u32 %s29, 1
        %s340 = scalar_lea.sflag [#allocation12], %s339
        %s341 = sand.u32 %s170, 1
        %s342 = smul.addr %s341, 8
        %s343 = scalar_lea.vmem [#allocation11], %s342
        %p344 = pneg %p211
        %p345 = pneg %p208
        %s346 = sand.u32 %s29, 1
        %s347 = scalar_lea.sflag [#allocation12], %s346
        %s348 = sand.u32 %s198, 1
        %s349 = smul.addr %s348, 8
        %s350 = scalar_lea.vmem [#allocation13], %s349
        %v351 = vld [vmem:[%s300] sm:$0xff]
        %v352 = vld [vmem:[#allocation5] sm:$0xff]
        %v353 = vld [vmem:[#allocation5 + $0x8] sm:$0xff]
        %v354 = vld [vmem:[#allocation5 + $0x10] sm:$0xff]
        %v355 = vld [vmem:[#allocation5 + $0x18] sm:$0xff]
        %v356 = vld [vmem:[#allocation5 + $0x20] sm:$0xff]
        %v357 = vld [vmem:[#allocation5 + $0x28] sm:$0xff]
        %v358 = vld [vmem:[#allocation5 + $0x30] sm:$0xff]
        %v359 = vld [vmem:[#allocation5 + $0x38] sm:$0xff]
        %v360 = vld [vmem:[#allocation5 + $0x40] sm:$0xff]
        %v361 = vld [vmem:[#allocation5 + $0x48] sm:$0xff]
        %v362 = vld [vmem:[#allocation5 + $0x50] sm:$0xff]
        %v363 = vld [vmem:[#allocation5 + $0x58] sm:$0xff]
        %v364 = vld [vmem:[#allocation5 + $0x60] sm:$0xff]
        %v365 = vld [vmem:[#allocation5 + $0x68] sm:$0xff]
        %v366 = vld [vmem:[#allocation5 + $0x70] sm:$0xff]
        %v367 = vld [vmem:[#allocation5 + $0x78] sm:$0xff]
        %368 = vmatprep.subr.mxu0 0.0
        %369 = vmatpush1.msra.mxu0 %v352
        %370 = vmatprep.subr.mxu0 0.0
        %371 = vmatpush1.msra.mxu0 %v353
        %372 = vmatprep.subr.mxu0 0.0
        %373 = vmatpush1.msra.mxu0 %v354
        %374 = vmatprep.subr.mxu0 0.0
        %375 = vmatpush1.msra.mxu0 %v355
        %376 = vmatprep.subr.mxu0 0.0
        %377 = vmatpush1.msra.mxu0 %v356
        %378 = vmatprep.subr.mxu0 0.0
        %379 = vmatpush1.msra.mxu0 %v357
        %380 = vmatprep.subr.mxu0 0.0
        %381 = vmatpush1.msra.mxu0 %v358
        %382 = vmatprep.subr.mxu0 0.0
        %383 = vmatpush1.msra.mxu0 %v359
        %384 = vmatprep.subr.mxu0 0.0
        %385 = vmatpush1.msra.mxu0 %v360
        %386 = vmatprep.subr.mxu0 0.0
        %387 = vmatpush1.msra.mxu0 %v361
        %388 = vmatprep.subr.mxu0 0.0
        %389 = vmatpush1.msra.mxu0 %v362
        %390 = vmatprep.subr.mxu0 0.0
        %391 = vmatpush1.msra.mxu0 %v363
        %392 = vmatprep.subr.mxu0 0.0
        %393 = vmatpush1.msra.mxu0 %v364
        %394 = vmatprep.subr.mxu0 0.0
        %395 = vmatpush1.msra.mxu0 %v365
        %396 = vmatprep.subr.mxu0 0.0
        %397 = vmatpush1.msra.mxu0 %v366
        %398 = vmatprep.subr.mxu0 0.0
        %399 = vmatpush1.msra.mxu0 %v367
        %400 = vmatprep.subr.mxu0 0.0
        %401 = vmatpush1.msra.mxu0 0.0
        %402 = vmatprep.subr.mxu0 0.0
        %403 = vmatpush1.msra.mxu0 0.0
        %404 = vmatprep.subr.mxu0 0.0
        %405 = vmatpush1.msra.mxu0 0.0
        %406 = vmatprep.subr.mxu0 0.0
        %407 = vmatpush1.msra.mxu0 0.0
        %408 = vmatprep.subr.mxu0 0.0
        %409 = vmatpush1.msra.mxu0 0.0
        %410 = vmatprep.subr.mxu0 0.0
        %411 = vmatpush1.msra.mxu0 0.0
        %412 = vmatprep.subr.mxu0 0.0
        %413 = vmatpush1.msra.mxu0 0.0
        %414 = vmatprep.subr.mxu0 0.0
        %415 = vmatpush1.msra.mxu0 0.0
        %416 = vmatprep.subr.mxu0 0.0
        %417 = vmatpush1.msra.mxu0 0.0
        %418 = vmatprep.subr.mxu0 0.0
        %419 = vmatpush1.msra.mxu0 0.0
        %420 = vmatprep.subr.mxu0 0.0
        %421 = vmatpush1.msra.mxu0 0.0
        %422 = vmatprep.subr.mxu0 0.0
        %423 = vmatpush1.msra.mxu0 0.0
        %424 = vmatprep.subr.mxu0 0.0
        %425 = vmatpush1.msra.mxu0 0.0
        %426 = vmatprep.subr.mxu0 0.0
        %427 = vmatpush1.msra.mxu0 0.0
        %428 = vmatprep.subr.mxu0 0.0
        %429 = vmatpush1.msra.mxu0 0.0
        %430 = vmatprep.subr.mxu0 0.0
        %431 = vmatpush1.msra.mxu0 0.0
        %432 = vmatprep.mubr.f32.mxu0 0.0
        %433 = vmatmul.mubr.f32.gmra.mrb[0].mxu0 %v351
        %v434 = vpop.f32.mrb[0].mxu0
        %v435 = vadd.f32 0.0, %v434
        %v436 = vpop.f32.mrb[0].mxu0
        %437 = vdwg.mxu0
        %v438 = vld [vmem:[#allocation7] sm:$0xff]
        %v439 = vld [vmem:[#allocation7 + $0x8] sm:$0xff]
        %v440 = vld [vmem:[#allocation7 + $0x10] sm:$0xff]
        %v441 = vld [vmem:[#allocation7 + $0x18] sm:$0xff]
        %v442 = vld [vmem:[#allocation7 + $0x20] sm:$0xff]
        %v443 = vld [vmem:[#allocation7 + $0x28] sm:$0xff]
        %v444 = vld [vmem:[#allocation7 + $0x30] sm:$0xff]
        %v445 = vld [vmem:[#allocation7 + $0x38] sm:$0xff]
        %v446 = vld [vmem:[#allocation7 + $0x40] sm:$0xff]
        %v447 = vld [vmem:[#allocation7 + $0x48] sm:$0xff]
        %v448 = vld [vmem:[#allocation7 + $0x50] sm:$0xff]
        %v449 = vld [vmem:[#allocation7 + $0x58] sm:$0xff]
        %v450 = vld [vmem:[#allocation7 + $0x60] sm:$0xff]
        %v451 = vld [vmem:[#allocation7 + $0x68] sm:$0xff]
        %v452 = vld [vmem:[#allocation7 + $0x70] sm:$0xff]
        %v453 = vld [vmem:[#allocation7 + $0x78] sm:$0xff]
        %454 = vmatprep.subr.mxu0 0.0
        %455 = vmatpush1.msra.mxu0 %v438
        %456 = vmatprep.subr.mxu0 0.0
        %457 = vmatpush1.msra.mxu0 %v439
        %458 = vmatprep.subr.mxu0 0.0
        %459 = vmatpush1.msra.mxu0 %v440
        %460 = vmatprep.subr.mxu0 0.0
        %461 = vmatpush1.msra.mxu0 %v441
        %462 = vmatprep.subr.mxu0 0.0
        %463 = vmatpush1.msra.mxu0 %v442
        %464 = vmatprep.subr.mxu0 0.0
        %465 = vmatpush1.msra.mxu0 %v443
        %466 = vmatprep.subr.mxu0 0.0
        %467 = vmatpush1.msra.mxu0 %v444
        %468 = vmatprep.subr.mxu0 0.0
        %469 = vmatpush1.msra.mxu0 %v445
        %470 = vmatprep.subr.mxu0 0.0
        %471 = vmatpush1.msra.mxu0 %v446
        %472 = vmatprep.subr.mxu0 0.0
        %473 = vmatpush1.msra.mxu0 %v447
        %474 = vmatprep.subr.mxu0 0.0
        %475 = vmatpush1.msra.mxu0 %v448
        %476 = vmatprep.subr.mxu0 0.0
        %477 = vmatpush1.msra.mxu0 %v449
        %478 = vmatprep.subr.mxu0 0.0
        %479 = vmatpush1.msra.mxu0 %v450
        %480 = vmatprep.subr.mxu0 0.0
        %481 = vmatpush1.msra.mxu0 %v451
        %482 = vmatprep.subr.mxu0 0.0
        %483 = vmatpush1.msra.mxu0 %v452
        %484 = vmatprep.subr.mxu0 0.0
        %485 = vmatpush1.msra.mxu0 %v453
        %486 = vmatprep.subr.mxu0 0.0
        %487 = vmatpush1.msra.mxu0 0.0
        %488 = vmatprep.subr.mxu0 0.0
        %489 = vmatpush1.msra.mxu0 0.0
        %490 = vmatprep.subr.mxu0 0.0
        %491 = vmatpush1.msra.mxu0 0.0
        %492 = vmatprep.subr.mxu0 0.0
        %493 = vmatpush1.msra.mxu0 0.0
        %494 = vmatprep.subr.mxu0 0.0
        %495 = vmatpush1.msra.mxu0 0.0
        %496 = vmatprep.subr.mxu0 0.0
        %497 = vmatpush1.msra.mxu0 0.0
        %498 = vmatprep.subr.mxu0 0.0
        %499 = vmatpush1.msra.mxu0 0.0
        %500 = vmatprep.subr.mxu0 0.0
        %501 = vmatpush1.msra.mxu0 0.0
        %502 = vmatprep.subr.mxu0 0.0
        %503 = vmatpush1.msra.mxu0 0.0
        %504 = vmatprep.subr.mxu0 0.0
        %505 = vmatpush1.msra.mxu0 0.0
        %506 = vmatprep.subr.mxu0 0.0
        %507 = vmatpush1.msra.mxu0 0.0
        %508 = vmatprep.subr.mxu0 0.0
        %509 = vmatpush1.msra.mxu0 0.0
        %510 = vmatprep.subr.mxu0 0.0
        %511 = vmatpush1.msra.mxu0 0.0
        %512 = vmatprep.subr.mxu0 0.0
        %513 = vmatpush1.msra.mxu0 0.0
        %514 = vmatprep.subr.mxu0 0.0
        %515 = vmatpush1.msra.mxu0 0.0
        %516 = vmatprep.subr.mxu0 0.0
        %517 = vmatpush1.msra.mxu0 0.0
        %518 = vmatprep.mubr.f32.mxu0 0.0
        %519 = vmatmul.mubr.f32.gmra.mrb[0].mxu0 %v351
        %v520 = vpop.f32.mrb[0].mxu0
        %v521 = vadd.f32 0.0, %v520
        %v522 = vpop.f32.mrb[0].mxu0
        %523 = vdwg.mxu0
        %v524 = vld [vmem:[#allocation8] sm:$0xff]
        %v525 = vld [vmem:[#allocation8 + $0x8] sm:$0xff]
        %v526 = vld [vmem:[#allocation8 + $0x10] sm:$0xff]
        %v527 = vld [vmem:[#allocation8 + $0x18] sm:$0xff]
        %v528 = vld [vmem:[#allocation8 + $0x20] sm:$0xff]
        %v529 = vld [vmem:[#allocation8 + $0x28] sm:$0xff]
        %v530 = vld [vmem:[#allocation8 + $0x30] sm:$0xff]
        %v531 = vld [vmem:[#allocation8 + $0x38] sm:$0xff]
        %v532 = vld [vmem:[#allocation8 + $0x40] sm:$0xff]
        %v533 = vld [vmem:[#allocation8 + $0x48] sm:$0xff]
        %v534 = vld [vmem:[#allocation8 + $0x50] sm:$0xff]
        %v535 = vld [vmem:[#allocation8 + $0x58] sm:$0xff]
        %v536 = vld [vmem:[#allocation8 + $0x60] sm:$0xff]
        %v537 = vld [vmem:[#allocation8 + $0x68] sm:$0xff]
        %v538 = vld [vmem:[#allocation8 + $0x70] sm:$0xff]
        %v539 = vld [vmem:[#allocation8 + $0x78] sm:$0xff]
        %540 = vmatprep.subr.mxu0 0.0
        %541 = vmatpush1.msra.mxu0 %v524
        %542 = vmatprep.subr.mxu0 0.0
        %543 = vmatpush1.msra.mxu0 %v525
        %544 = vmatprep.subr.mxu0 0.0
        %545 = vmatpush1.msra.mxu0 %v526
        %546 = vmatprep.subr.mxu0 0.0
        %547 = vmatpush1.msra.mxu0 %v527
        %548 = vmatprep.subr.mxu0 0.0
        %549 = vmatpush1.msra.mxu0 %v528
        %550 = vmatprep.subr.mxu0 0.0
        %551 = vmatpush1.msra.mxu0 %v529
        %552 = vmatprep.subr.mxu0 0.0
        %553 = vmatpush1.msra.mxu0 %v530
        %554 = vmatprep.subr.mxu0 0.0
        %555 = vmatpush1.msra.mxu0 %v531
        %556 = vmatprep.subr.mxu0 0.0
        %557 = vmatpush1.msra.mxu0 %v532
        %558 = vmatprep.subr.mxu0 0.0
        %559 = vmatpush1.msra.mxu0 %v533
        %560 = vmatprep.subr.mxu0 0.0
        %561 = vmatpush1.msra.mxu0 %v534
        %562 = vmatprep.subr.mxu0 0.0
        %563 = vmatpush1.msra.mxu0 %v535
        %564 = vmatprep.subr.mxu0 0.0
        %565 = vmatpush1.msra.mxu0 %v536
        %566 = vmatprep.subr.mxu0 0.0
        %567 = vmatpush1.msra.mxu0 %v537
        %568 = vmatprep.subr.mxu0 0.0
        %569 = vmatpush1.msra.mxu0 %v538
        %570 = vmatprep.subr.mxu0 0.0
        %571 = vmatpush1.msra.mxu0 %v539
        %572 = vmatprep.subr.mxu0 0.0
        %573 = vmatpush1.msra.mxu0 0.0
        %574 = vmatprep.subr.mxu0 0.0
        %575 = vmatpush1.msra.mxu0 0.0
        %576 = vmatprep.subr.mxu0 0.0
        %577 = vmatpush1.msra.mxu0 0.0
        %578 = vmatprep.subr.mxu0 0.0
        %579 = vmatpush1.msra.mxu0 0.0
        %580 = vmatprep.subr.mxu0 0.0
        %581 = vmatpush1.msra.mxu0 0.0
        %582 = vmatprep.subr.mxu0 0.0
        %583 = vmatpush1.msra.mxu0 0.0
        %584 = vmatprep.subr.mxu0 0.0
        %585 = vmatpush1.msra.mxu0 0.0
        %586 = vmatprep.subr.mxu0 0.0
        %587 = vmatpush1.msra.mxu0 0.0
        %588 = vmatprep.subr.mxu0 0.0
        %589 = vmatpush1.msra.mxu0 0.0
        %590 = vmatprep.subr.mxu0 0.0
        %591 = vmatpush1.msra.mxu0 0.0
        %592 = vmatprep.subr.mxu0 0.0
        %593 = vmatpush1.msra.mxu0 0.0
        %594 = vmatprep.subr.mxu0 0.0
        %595 = vmatpush1.msra.mxu0 0.0
        %596 = vmatprep.subr.mxu0 0.0
        %597 = vmatpush1.msra.mxu0 0.0
        %598 = vmatprep.subr.mxu0 0.0
        %599 = vmatpush1.msra.mxu0 0.0
        %600 = vmatprep.subr.mxu0 0.0
        %601 = vmatpush1.msra.mxu0 0.0
        %602 = vmatprep.subr.mxu0 0.0
        %603 = vmatpush1.msra.mxu0 0.0
        %604 = vmatprep.mubr.f32.mxu0 0.0
        %605 = vmatmul.mubr.f32.gmra.mrb[0].mxu0 %v351
        %v606 = vpop.f32.mrb[0].mxu0
        %v607 = vadd.f32 0.0, %v606
        %v608 = vpop.f32.mrb[0].mxu0
        %609 = vdwg.mxu0
        %v610 = vmul.f32 %v435, %v435
        %611 = vadd.xlane.f32.xlu0 %v610
        %v612 = vpop.xlane.xlu0 %611
        %v613 = vrcp.pop 128.0
        %v614 = vmul.f32 %v612, %v613
        %v615 = vadd.f32 %v614, 1e-05
        %v616 = vrsqrt.pop %v615
        %v617 = vmul.f32 %v616, 0.17677669
        %v618 = vmul.f32 %v435, %v617
        %v619 = vmul.f32 %v521, %v521
        %620 = vadd.xlane.f32.xlu0 %v619
        %v621 = vpop.xlane.xlu0 %620
        %v622 = vmul.f32 %v621, %v613
        %v623 = vadd.f32 %v622, 1e-05
        %v624 = vrsqrt.pop %v623
        %v625 = vmul.f32 %v521, %v624
        %626 = vst [vmem:[%s336] sm:$0xff] %v618
        %627 = vst [vmem:[%s343] sm:$0xff] %v625
        %628 = vst [vmem:[%s350] sm:$0xff] %v607
        %s629 = sand.u32 %s142, 1
        %s630 = scalar_lea.sflag [#allocation4], %s629
        %s631 = sand.u32 %s142, 1
        %s632 = smul.addr %s631, 8
        %s633 = scalar_lea.vmem [#allocation10], %s632
        %s634 = sand.u32 %s29, 1
        %s635 = scalar_lea.sflag [#allocation12], %s634
        %s636 = sand.u32 %s170, 1
        %s637 = smul.addr %s636, 8
        %s638 = scalar_lea.vmem [#allocation11], %s637
        %s639 = sand.u32 %s29, 1
        %s640 = scalar_lea.sflag [#allocation12], %s639
        %s641 = sand.u32 %s198, 1
        %s642 = smul.addr %s641, 8
        %s643 = scalar_lea.vmem [#allocation13], %s642
        // Predicated region
        $region53: #{tpu_custom_call.1} parent=35 // pred_check
          %p644 = pneg %p152
        $region54: #{tpu_custom_call.1} parent=35 // pred_check_branch
          %646 = sbr.rel (%p644) target = $region56
        $region55: #{tpu_custom_call.1} parent=35 // pred_region
          %s648 = ssub.s32 128, 128
          %649 = vsyncadd %s630, %s648
          %s650 = smul.addr %s33, 2
          %s651 = sadd.s32 %s34, %s650
          %s652 = smul.addr %s651, 128
          %s653 = scalar_lea.hbm %s4, %s652
          %s655 = sshll.u32 %s633, 4
          %s656 = int_to_ptr.vmem [resolvable:$true] %s655
          %658 = dma.vmem_to_hbm [thread:$0]  %s656, 128, %s653, %s630
        $region56: #{tpu_custom_call.1} parent=35 // pred_fallthru
          _
        // Predicated region
        $region57: #{tpu_custom_call.1} parent=35 // pred_check
          %p659 = pneg %p180
        $region58: #{tpu_custom_call.1} parent=35 // pred_check_branch
          %661 = sbr.rel (%p659) target = $region60
        $region59: #{tpu_custom_call.1} parent=35 // pred_region
          %s663 = ssub.s32 128, 128
          %664 = vsyncadd %s635, %s663
          %s665 = smul.addr %s33, 2
          %s666 = sadd.s32 %s34, %s665
          %s667 = smul.addr %s666, 128
          %s668 = scalar_lea.hbm %s5, %s667
          %s670 = sshll.u32 %s638, 4
          %s671 = int_to_ptr.vmem [resolvable:$true] %s670
          %673 = dma.vmem_to_hbm [thread:$0]  %s671, 128, %s668, %s635
        $region60: #{tpu_custom_call.1} parent=35 // pred_fallthru
          _
        // Predicated region
        $region61: #{tpu_custom_call.1} parent=35 // pred_check
          %p674 = pneg %p208
        $region62: #{tpu_custom_call.1} parent=35 // pred_check_branch
          %676 = sbr.rel (%p674) target = $region64
        $region63: #{tpu_custom_call.1} parent=35 // pred_region
          %s678 = ssub.s32 128, 128
          %679 = vsyncadd %s640, %s678
          %s680 = smul.addr %s33, 2
          %s681 = sadd.s32 %s34, %s680
          %s682 = smul.addr %s681, 128
          %s683 = scalar_lea.hbm %s6, %s682
          %s685 = sshll.u32 %s643, 4
          %s686 = int_to_ptr.vmem [resolvable:$true] %s685
          %688 = dma.vmem_to_hbm [thread:$0]  %s686, 128, %s683, %s640
        $region64: #{tpu_custom_call.1} parent=35 // pred_fallthru
          _
      $region36: #{tpu_custom_call.1} parent=5 // pred_fallthru
        _
      %p689 = scmp.le.s32.totalorder 2, %s24
      // Predicated region
      $region65: #{tpu_custom_call.1} parent=5 // pred_check
        %p690 = pneg %p689
      $region66: #{tpu_custom_call.1} parent=5 // pred_check_branch
        %692 = sbr.rel (%p690) target = $region68
      $region67: #{tpu_custom_call.1} parent=5 // pred_region
        %s693 = ssub.s32 %s24, 2
        // Predicated region
        $region69: #{tpu_custom_call.1} parent=67 // pred_check
          %p694 = pneg %p158
        $region70: #{tpu_custom_call.1} parent=67 // pred_check_branch
          %696 = sbr.rel (%p694) target = $region72
        $region71: #{tpu_custom_call.1} parent=67 // pred_region
          %s697 = sand.u32 %s143, 1
          %s698 = scalar_lea.sflag [#allocation4], %s697
          %s699 = sand.u32 %s143, 1
          %s700 = smul.addr %s699, 8
          %s701 = scalar_lea.vmem [#allocation10], %s700
          %702 = dma.done %s698, 128
        $region72: #{tpu_custom_call.1} parent=67 // pred_fallthru
          _
        // Predicated region
        $region73: #{tpu_custom_call.1} parent=67 // pred_check
          %p703 = pneg %p186
        $region74: #{tpu_custom_call.1} parent=67 // pred_check_branch
          %705 = sbr.rel (%p703) target = $region76
        $region75: #{tpu_custom_call.1} parent=67 // pred_region
          %s706 = sand.u32 %s30, 1
          %s707 = scalar_lea.sflag [#allocation12], %s706
          %s708 = sand.u32 %s171, 1
          %s709 = smul.addr %s708, 8
          %s710 = scalar_lea.vmem [#allocation11], %s709
          %711 = dma.done %s707, 128
        $region76: #{tpu_custom_call.1} parent=67 // pred_fallthru
          _
        // Predicated region
        $region77: #{tpu_custom_call.1} parent=67 // pred_check
          %p712 = pneg %p214
        $region78: #{tpu_custom_call.1} parent=67 // pred_check_branch
          %714 = sbr.rel (%p712) target = $region80
        $region79: #{tpu_custom_call.1} parent=67 // pred_region
          %s715 = sand.u32 %s30, 1
          %s716 = scalar_lea.sflag [#allocation12], %s715
          %s717 = sand.u32 %s199, 1
          %s718 = smul.addr %s717, 8
          %s719 = scalar_lea.vmem [#allocation13], %s718
          %720 = dma.done %s716, 128
        $region80: #{tpu_custom_call.1} parent=67 // pred_fallthru
          _
      $region68: #{tpu_custom_call.1} parent=5 // pred_fallthru
        _
    $region6: #{tpu_custom_call.1} parent=1 // loop_footer
      %s28 = sadd.s32 1, %s24
    $region7: #{tpu_custom_call.1} parent=1 // loop_footer_branch
      %23 = sbr.rel target = $region3
    $region8: #{tpu_custom_call.1} parent=1 // loop_exit
      _
    %721 = vsyncpa [#allocation3], 1
    %s722 = scalar_lea.sflag [#allocation3], 1
    %723 = vsyncpa %s722, 1
    %724 = vsyncpa [#allocation6], 1
    %725 = vsyncpa [#allocation9], 1
    %726 = vsyncpa [#allocation4], 1
    %s727 = scalar_lea.sflag [#allocation4], 1
    %728 = vsyncpa %s727, 1
    %729 = vsyncpa [#allocation12], 1
    %s730 = scalar_lea.sflag [#allocation12], 1
    %731 = vsyncpa %s730, 1

</llo_original>
